<compile_context>
chip_gen: v7x
topology: tpu7x:2x2x1
jax: 0.10.0
libtpu: 0.0.40
codegen_flags: <defaults>
</compile_context>

<pallas_src>
import functools

import jax
import jax.numpy as jnp
from jax.experimental import pallas as pl
from jax.experimental.pallas import tpu as pltpu


def _mtloss_kernel_none(packed_ref, out_ref):
    # packed_ref: (3, n_tasks) f32 = [losses; log_vars; is_regression]
    data = packed_ref[...]
    losses = data[0:1, :]
    log_vars = data[1:2, :]
    is_reg = data[2:3, :]

    scale = jnp.where(is_reg != 0.0, 0.5, 1.0)          # 1 / (is_reg + 1) for 0/1 indicator
    mt = losses * jnp.exp(-log_vars) * scale + 0.5 * log_vars
    out_ref[...] = mt.astype(out_ref.dtype)


def _mtloss_kernel_reduce(packed_ref, out_ref, *, post_scale):
    # packed_ref: (3, n_tasks) f32; out_ref: (1, 1) f32 in SMEM.
    data = packed_ref[...]
    losses = data[0:1, :]
    log_vars = data[1:2, :]
    is_reg = data[2:3, :]

    scale = jnp.where(is_reg != 0.0, 0.5, 1.0)
    mt = losses * jnp.exp(-log_vars) * scale + 0.5 * log_vars
    # post_scale = 1.0 for 'sum', 1/n_tasks for 'mean' (multiply, no divide).
    out_ref[0, 0] = jnp.sum(mt) * post_scale


def multi_task_loss(losses, log_vars, is_regression, reduction="none"):
    """losses, log_vars, is_regression: 1-D arrays of length n_tasks."""
    n_tasks = losses.shape[0]
    dtype = losses.dtype

    # Pack all three tiny vectors into a single (3, n_tasks) f32 slab -> one DMA.
    # Compute in f32 inside the kernel (v5e has no bf16 VPU/EUP); cast at store.
    packed = jnp.stack(
        [
            losses.astype(jnp.float32),
            log_vars.astype(jnp.float32),
            is_regression.astype(jnp.float32),
        ],
        axis=0,
    )

    in_spec = pl.BlockSpec((3, n_tasks), lambda: (0, 0))

    # NOTE: at n_tasks ~ O(10-100) this call is launch/DMA-overhead bound; in a
    # real model this math would be fused into the surrounding loss kernel.
    if reduction == "none":
        out = pl.pallas_call(
            _mtloss_kernel_none,
            out_shape=jax.ShapeDtypeStruct((1, n_tasks), dtype),
            grid=(),
            in_specs=[in_spec],
            out_specs=pl.BlockSpec((1, n_tasks), lambda: (0, 0)),
        )(packed)
        return out.reshape(n_tasks)

    if reduction in ("sum", "mean"):
        post_scale = 1.0 if reduction == "sum" else 1.0 / float(n_tasks)
        kernel = functools.partial(_mtloss_kernel_reduce, post_scale=post_scale)
        out = pl.pallas_call(
            kernel,
            out_shape=jax.ShapeDtypeStruct((1, 1), jnp.float32),
            grid=(),
            in_specs=[in_spec],
            out_specs=pl.BlockSpec(memory_space=pltpu.MemorySpace.SMEM),
        )(packed)
        return out.reshape(()).astype(dtype)

    raise ValueError(f"unknown reduction: {reduction}")


def multi_task_loss_ref(losses, log_vars, is_regression, reduction="none"):
    """Pure-JAX reference mirroring the PyTorch module verbatim."""
    dtype = losses.dtype
    stds = jnp.exp(log_vars).astype(dtype) ** 0.5
    is_reg = is_regression.astype(dtype)
    coeffs = 1.0 / ((is_reg + 1.0) * stds**2)
    mt = coeffs * losses + jnp.log(stds)
    if reduction == "sum":
        return mt.sum()
    if reduction == "mean":
        return mt.mean()
    return mt


if __name__ == "__main__":
    key = jax.random.PRNGKey(0)
    k_losses, k_logvars = jax.random.split(key)

    n_tasks = 8
    # Module init sets log_vars = zeros(n_tasks); perturb deterministically so
    # the coefficients are non-trivial.
    log_vars = 0.1 * jax.random.normal(k_logvars, (n_tasks,), dtype=jnp.float32)
    is_regression = jnp.array([1, 0, 1, 0, 1, 1, 0, 0], dtype=jnp.float32)

    # Example per-task losses (positive, like real losses).
    losses = jnp.abs(jax.random.normal(k_losses, (n_tasks,), dtype=jnp.float32))

    ok = True
    for reduction in ("none", "sum", "mean"):
        out = multi_task_loss(losses, log_vars, is_regression, reduction=reduction)
        out = jax.block_until_ready(out)
        ref = multi_task_loss_ref(losses, log_vars, is_regression, reduction=reduction)
        if not jnp.allclose(out, ref, rtol=1e-5, atol=1e-5):
            ok = False
            print(f"MISMATCH for reduction={reduction}: {out} vs {ref}")

    if ok:
        print("KERNEL_OK")
</pallas_src>

<mosaic_0001>
module attributes {stable_mosaic.version = 11 : i64} {
  func.func @_mtloss_kernel_none(%arg0: memref<3x8xf32, #tpu.memory_space<vmem>>, %arg1: memref<1x8xf32, #tpu.memory_space<vmem>>) attributes {dimension_semantics = [], scalar_prefetch = 0 : i64, scratch_operands = 0 : i64, tpu.core_type = #tpu.core_type<tc>} {
    %c0 = arith.constant 0 : index
    %c0_0 = arith.constant 0 : index
    %0 = vector.load %arg0[%c0, %c0_0] : memref<3x8xf32, #tpu.memory_space<vmem>>, vector<3x8xf32>
    %1 = vector.extract_strided_slice %0 {offsets = [0, 0], sizes = [1, 8], strides = [1, 1]} : vector<3x8xf32> to vector<1x8xf32>
    %2 = vector.extract_strided_slice %0 {offsets = [1, 0], sizes = [1, 8], strides = [1, 1]} : vector<3x8xf32> to vector<1x8xf32>
    %3 = vector.extract_strided_slice %0 {offsets = [2, 0], sizes = [1, 8], strides = [1, 1]} : vector<3x8xf32> to vector<1x8xf32>
    %cst = arith.constant 0.000000e+00 : f32
    %4 = vector.broadcast %cst : f32 to vector<1x8xf32>
    %5 = arith.cmpf one, %3, %4 : vector<1x8xf32>
    %cst_1 = arith.constant 5.000000e-01 : f32
    %cst_2 = arith.constant 1.000000e+00 : f32
    %6 = vector.broadcast %cst_1 : f32 to vector<1x8xf32>
    %7 = vector.broadcast %cst_2 : f32 to vector<1x8xf32>
    %8 = arith.select %5, %6, %7 : vector<1x8xi1>, vector<1x8xf32>
    %cst_3 = arith.constant 0.000000e+00 : f32
    %9 = vector.broadcast %cst_3 : f32 to vector<1x8xf32>
    %10 = arith.subf %9, %2 : vector<1x8xf32>
    %11 = math.exp %10 : vector<1x8xf32>
    %12 = arith.mulf %1, %11 : vector<1x8xf32>
    %13 = arith.mulf %12, %8 : vector<1x8xf32>
    %cst_4 = arith.constant 5.000000e-01 : f32
    %14 = vector.broadcast %cst_4 : f32 to vector<1x8xf32>
    %15 = arith.mulf %14, %2 : vector<1x8xf32>
    %16 = arith.addf %13, %15 : vector<1x8xf32>
    %c0_5 = arith.constant 0 : index
    %c0_6 = arith.constant 0 : index
    %17 = vector.load %arg1[%c0_5, %c0_6] : memref<1x8xf32, #tpu.memory_space<vmem>>, vector<1x8xf32>
    tpu.vector_store %arg1[%c0_5, %c0_6], %16 {strides = array<i32>} : memref<1x8xf32, #tpu.memory_space<vmem>>, vector<1x8xf32>,
    return
  }
}

</mosaic_0001>

<llo_original>
// kernel: tpu_custom_call.1
$region0: #{tpu_custom_call.1}
  #allocation0 [shape = 'u32[]', space=smem, size = 0x4, offset = 0x4, fixed_abs, tag = 'smem constant byte address 0x4 - core index']
  #allocation1 [shape = 'u32[144,128]{1,0:T(1,128)}', space=vmem, size = 0x12000, scoped, tag = 'internal scratch']
  %s0 = inlined_call_operand.hbm [shape: f32[3,8], index: 0, kind: input, shape index: {}]
  %s1 = inlined_call_operand.hbm [shape: f32[1,8], index: 1, kind: output, shape index: {}]
  %s2 = sld [smem:[#allocation0]]
  $region18: #{tpu_custom_call.1} parent=0
    _
  %s4 = ssub.s32 1, %s2
  %s5 = scalar_select 0, %s4, %s2
  $region1: #{tpu_custom_call.1} parent=0
    #allocation2 [shape = 'u8[2048]{0}', space=vmem, size = 0x800, scoped, tag = 'input window, operand 0, single buffered']
    #allocation3 [shape = 's32[1]{0}', space=sflag, size = 0x4, scoped, tag = 'scoped memory for tpu_custom_call.1']
    #allocation4 [shape = 's32[1]{0}', space=sflag, size = 0x4, scoped, tag = 'scoped memory for tpu_custom_call.1']
    #allocation5 [shape = 'u8[512]{0}', space=vmem, size = 0x400, scoped, tag = 'output window, operand 0, single buffered']
    %6 = vsyncpa [#allocation3], 0
    %7 = vsyncpa [#allocation4], 0
    // Predicated region
    $region2: #{tpu_custom_call.1} parent=1 // pred_check
      _
    $region3: #{tpu_custom_call.1} parent=1 // pred_check_branch
      %9 = sbr.rel (0) target = $region5
    $region4: #{tpu_custom_call.1} parent=1 // pred_region
      %s11 = ssub.s32 64, 64
      %12 = vsyncadd [#allocation3], %s11
      %s14 = sshll.u32 [#allocation2], 4
      %s15 = int_to_ptr.vmem [resolvable:$true] %s14
      %17 = dma.hbm_to_vmem [thread:$0]  %s0, 64, %s15, [#allocation3]
    $region5: #{tpu_custom_call.1} parent=1 // pred_fallthru
      _
    // Predicated region
    $region6: #{tpu_custom_call.1} parent=1 // pred_check
      _
    $region7: #{tpu_custom_call.1} parent=1 // pred_check_branch
      %19 = sbr.rel (0) target = $region9
    $region8: #{tpu_custom_call.1} parent=1 // pred_region
      %20 = dma.done [#allocation3], 64
    $region9: #{tpu_custom_call.1} parent=1 // pred_fallthru
      _
    %v21 = vld [vmem:[#allocation2] sm:$0x7]
    %vm22 = vcmp.ne.f32.partialorder %v21, 0.0
    %v23 = vsel %vm22, 0.5, 1.0
    %v24 = vsub.f32 0.0, %v21
    %v25 = vmul.f32 %v24, 1.442695
    %v26 = vpow.pop %v25
    %v28 = vrot.slane %v26, 1
    %v30 = vmul.f32 %v21, %v28
    %v32 = vrot.slane %v23, 2
    %v34 = vmul.f32 %v30, %v32
    %v35 = vmul.f32 %v21, 0.5
    %v37 = vrot.slane %v35, 1
    %v39 = vadd.f32 %v34, %v37
    %vm40 = vcmask 57344
    %41 = vst.msk [vmem:[#allocation5] sm:$0x1] %vm40, %v39
    // Predicated region
    $region10: #{tpu_custom_call.1} parent=1 // pred_check
      _
    $region11: #{tpu_custom_call.1} parent=1 // pred_check_branch
      %43 = sbr.rel (0) target = $region13
    $region12: #{tpu_custom_call.1} parent=1 // pred_region
      %s45 = ssub.s32 16, 16
      %46 = vsyncadd [#allocation4], %s45
      %s48 = sshll.u32 [#allocation5], 4
      %s49 = int_to_ptr.vmem [resolvable:$true] %s48
      %51 = dma.vmem_to_hbm [thread:$0]  %s49, 16, %s1, [#allocation4]
    $region13: #{tpu_custom_call.1} parent=1 // pred_fallthru
      _
    // Predicated region
    $region14: #{tpu_custom_call.1} parent=1 // pred_check
      _
    $region15: #{tpu_custom_call.1} parent=1 // pred_check_branch
      %53 = sbr.rel (0) target = $region17
    $region16: #{tpu_custom_call.1} parent=1 // pred_region
      %54 = dma.done [#allocation4], 16
    $region17: #{tpu_custom_call.1} parent=1 // pred_fallthru
      _
    %55 = vsyncpa [#allocation3], 1
    %56 = vsyncpa [#allocation4], 1

</llo_original>
